<compile_context>
chip_gen: v5e
topology: v5e:2x2
jax: 0.10.0
libtpu: 0.0.40
codegen_flags: <defaults>
</compile_context>

<pallas_src>
import functools

import jax
import jax.numpy as jnp
from jax.experimental import pallas as pl
from jax.experimental.pallas import tpu as pltpu

FEATURE_SIZE = 11
LATENT_SIZE = 10
CONDITION_SIZE = 37

H1, H2, H3 = 64, 32, 16                  # encoder widths
D1, D2, D3 = 16, 32, 32                  # decoder hidden widths

# Packed lane-dense output slab (B, 32):  recon | mu | var | zero-pad
OUT_W = 32
RECON_OFF = 0
MU_OFF = FEATURE_SIZE                    # 11
VAR_OFF = FEATURE_SIZE + LATENT_SIZE     # 21

TB_MAX = 8192                            # upper bound on batch rows per grid step

# Advisory per-row cost (for XLA scheduling around the custom call)
_FLOPS_PER_ROW = 2 * (FEATURE_SIZE * H1 + CONDITION_SIZE * (H1 + D1) + H1 * H2
                      + H2 * H3 + H3 * OUT_W + LATENT_SIZE * D1 + D1 * D2
                      + D2 * D3 + D3 * OUT_W)
_TRANS_PER_ROW = (H1 + H2 + H3 + D1 + D2 + D3) + 2 * OUT_W + LATENT_SIZE
_IO_BYTES_PER_ROW = 4 * (FEATURE_SIZE + CONDITION_SIZE + LATENT_SIZE + OUT_W)


def ekvae_kernel(x_ref, c_ref, eps_ref, w1x_ref, wc_ref, w2_ref, w3_ref, wh_ref,
                 wd1z_ref, wd2_ref, wd3_ref, wd4_ref, b_ref, out_ref):
    dot = functools.partial(jnp.dot, preferred_element_type=jnp.float32)

    x = x_ref[...]                                      # (TB, 11)
    c = c_ref[...]                                      # (TB, 37)
    eps = eps_ref[...]                                  # (TB, 10)
    tb = x.shape[0]

    # biases: one (8,128) slab, one row per layer
    b1, b2, b3 = b_ref[0:1, :H1], b_ref[1:2, :H2], b_ref[2:3, :H3]
    bh = b_ref[3:4, :OUT_W]
    bd1, bd2, bd3 = b_ref[4:5, :D1], b_ref[5:6, :D2], b_ref[6:7, :D3]
    bd4 = b_ref[7:8, :OUT_W]

    # Fused condition matmul: cols [:64]   = encoder layer-1 c-contribution,
    #                         cols [64:80] = decoder layer-1 c-contribution.
    lc = dot(c, wc_ref[...])                            # (TB, 80)
    h = jnp.tanh(dot(x, w1x_ref[...]) + lc[:, :H1] + b1)    # (TB, 64)
    dec1_c = lc[:, H1:H1 + D1]                          # (TB, 16)

    h = jnp.tanh(dot(h, w2_ref[...]) + b2)              # (TB, 32)
    h = jnp.tanh(dot(h, w3_ref[...]) + b3)              # (TB, 16)

    # Fused mu/var head, emitted directly at the packed-output lane positions:
    # mu -> lanes [11,21), var -> lanes [21,31), zeros elsewhere.
    head = dot(h, wh_ref[...]) + bh                     # (TB, 32)
    col = jax.lax.broadcasted_iota(jnp.int32, (tb, OUT_W), 1)
    is_var = jnp.logical_and(col >= VAR_OFF, col < VAR_OFF + LATENT_SIZE)
    # numerically stable softplus
    softplus = jnp.maximum(head, 0.0) + jnp.log(1.0 + jnp.exp(-jnp.abs(head)))
    mv = jnp.where(is_var, softplus, head)              # (TB, 32): 0 | mu | var | 0

    mu = mv[:, MU_OFF:MU_OFF + LATENT_SIZE]             # (TB, 10)
    var = mv[:, VAR_OFF:VAR_OFF + LATENT_SIZE]          # (TB, 10)

    # reparameterize: z = mu + eps * exp(0.5 * softplus(var_head))   (matches module)
    z = mu + eps * jnp.exp(0.5 * var)

    # decoder
    d = jnp.tanh(dec1_c + dot(z, wd1z_ref[...]) + bd1)  # (TB, 16)
    d = jnp.tanh(dot(d, wd2_ref[...]) + bd2)            # (TB, 32)
    d = jnp.tanh(dot(d, wd3_ref[...]) + bd3)            # (TB, 32)

    # wd4 is widened to (32,32) with zero cols [11,32) so recon lands at lanes
    # [0,11); adding `mv` assembles recon|mu|var -> one full-tile packed store.
    out_ref[...] = dot(d, wd4_ref[...]) + bd4 + mv


def init_params(key):
    """Xavier-normal weights stored as (in, out), zero biases (mirrors initialize_weights)."""
    def xavier(k, fi, fo):
        return ((2.0 / (fi + fo)) ** 0.5) * jax.random.normal(k, (fi, fo), jnp.float32)

    ks = jax.random.split(key, 9)
    zeros = lambda n: jnp.zeros((n,), jnp.float32)
    enc_in = FEATURE_SIZE + CONDITION_SIZE
    dec_in = LATENT_SIZE + CONDITION_SIZE
    return dict(
        enc_w1=xavier(ks[0], enc_in, H1), enc_b1=zeros(H1),
        enc_w2=xavier(ks[1], H1, H2),     enc_b2=zeros(H2),
        enc_w3=xavier(ks[2], H2, H3),     enc_b3=zeros(H3),
        mean_w=xavier(ks[3], H3, LATENT_SIZE), mean_b=zeros(LATENT_SIZE),
        var_w=xavier(ks[4], H3, LATENT_SIZE),  var_b=zeros(LATENT_SIZE),
        dec_w1=xavier(ks[5], dec_in, D1), dec_b1=zeros(D1),
        dec_w2=xavier(ks[6], D1, D2),     dec_b2=zeros(D2),
        dec_w3=xavier(ks[7], D2, D3),     dec_b3=zeros(D3),
        dec_w4=xavier(ks[8], D3, FEATURE_SIZE), dec_b4=zeros(FEATURE_SIZE),
    )


def pack_params(p):
    """Pack module-layout params into lane-dense kernel slabs (done once)."""
    f32 = jnp.float32

    w1x = p["enc_w1"][:FEATURE_SIZE]                           # (11, 64) x -> enc layer 1
    # fused condition weight: [enc layer-1 c-part (64) | dec layer-1 c-part (16)]
    wc = jnp.concatenate([p["enc_w1"][FEATURE_SIZE:],
                          p["dec_w1"][LATENT_SIZE:]], axis=1)  # (37, 80)

    # fused mu/var head placed at the packed-output lanes (all other cols stay zero)
    wh = jnp.zeros((H3, OUT_W), f32)
    wh = wh.at[:, MU_OFF:MU_OFF + LATENT_SIZE].set(p["mean_w"])
    wh = wh.at[:, VAR_OFF:VAR_OFF + LATENT_SIZE].set(p["var_w"])

    # last decoder layer widened so recon lands at packed-output lanes [0,11)
    wd4 = jnp.zeros((D3, OUT_W), f32)
    wd4 = wd4.at[:, RECON_OFF:RECON_OFF + FEATURE_SIZE].set(p["dec_w4"])

    # all 10 bias vectors stacked into one (8, 128) slab
    bias = jnp.zeros((8, 128), f32)
    bias = bias.at[0, :H1].set(p["enc_b1"])
    bias = bias.at[1, :H2].set(p["enc_b2"])
    bias = bias.at[2, :H3].set(p["enc_b3"])
    bias = bias.at[3, MU_OFF:MU_OFF + LATENT_SIZE].set(p["mean_b"])
    bias = bias.at[3, VAR_OFF:VAR_OFF + LATENT_SIZE].set(p["var_b"])
    bias = bias.at[4, :D1].set(p["dec_b1"])
    bias = bias.at[5, :D2].set(p["dec_b2"])
    bias = bias.at[6, :D3].set(p["dec_b3"])
    bias = bias.at[7, RECON_OFF:RECON_OFF + FEATURE_SIZE].set(p["dec_b4"])

    return dict(w1x=w1x, wc=wc, w2=p["enc_w2"], w3=p["enc_w3"], wh=wh,
                wd1z=p["dec_w1"][:LATENT_SIZE], wd2=p["dec_w2"], wd3=p["dec_w3"],
                wd4=wd4, bias=bias)


def _round_up(n, m):
    return ((n + m - 1) // m) * m


def _pad_rows(a, n):
    return a if a.shape[0] == n else jnp.pad(a, ((0, n - a.shape[0]), (0, 0)))


@jax.jit
def ekvae_forward(x, c, eps, packed):
    """x: (B,11,1), c: (B,37,1), eps: (B,10) -> (recon (B,11,1), mu (B,10), var (B,10))."""
    B = x.shape[0]
    x2 = jnp.squeeze(x, axis=-1).astype(jnp.float32)     # (B, 11): reshape, no HBM pass
    c2 = jnp.squeeze(c, axis=-1).astype(jnp.float32)     # (B, 37)
    eps = eps.astype(jnp.float32)                        # (B, 10)

    # Batch tile: large enough to amortize the ~0.35us/step grid overhead, small
    # enough that the double-buffered (TB,58)-in / (TB,32)-out pipeline stays well
    # under every generation's scoped-VMEM default (<6 MiB at TB=8192).  When the
    # batch allows, force >= 2 grid steps so ("parallel",) uses both v7x cores.
    TB = min(TB_MAX, _round_up(B, 8))
    if TB > 8 and _round_up(B, TB) == TB:
        TB = _round_up((TB + 1) // 2, 8)
    B_pad = _round_up(B, TB)

    x2 = _pad_rows(x2, B_pad)
    c2 = _pad_rows(c2, B_pad)
    eps_p = _pad_rows(eps, B_pad)

    def batch_spec(width):
        return pl.BlockSpec((TB, width), lambda i: (i, 0))

    def resident(arr):   # same block every step -> stays VMEM-resident across the grid
        return pl.BlockSpec(arr.shape, lambda i: (0, 0))

    weights = (packed["w1x"], packed["wc"], packed["w2"], packed["w3"], packed["wh"],
               packed["wd1z"], packed["wd2"], packed["wd3"], packed["wd4"],
               packed["bias"])
    weight_bytes = sum(int(w.size) * 4 for w in weights)

    out = pl.pallas_call(
        ekvae_kernel,
        out_shape=jax.ShapeDtypeStruct((B_pad, OUT_W), jnp.float32),
        grid=(B_pad // TB,),
        in_specs=[batch_spec(FEATURE_SIZE), batch_spec(CONDITION_SIZE),
                  batch_spec(LATENT_SIZE)] + [resident(w) for w in weights],
        out_specs=pl.BlockSpec((TB, OUT_W), lambda i: (i, 0)),
        compiler_params=pltpu.CompilerParams(
            dimension_semantics=("parallel",)),          # megacore split on v7x
        cost_estimate=pl.CostEstimate(
            flops=B_pad * _FLOPS_PER_ROW,
            transcendentals=B_pad * _TRANS_PER_ROW,
            bytes_accessed=B_pad * _IO_BYTES_PER_ROW + weight_bytes),
    )(x2, c2, eps_p, *weights)

    out = out[:B]
    recon = out[:, RECON_OFF:RECON_OFF + FEATURE_SIZE].reshape(-1, FEATURE_SIZE, 1)
    mu = out[:, MU_OFF:MU_OFF + LATENT_SIZE]
    var = out[:, VAR_OFF:VAR_OFF + LATENT_SIZE]
    return recon, mu, var


def ekvae_reference(x, c, eps, p):
    """Pure-JAX mirror of EK_VAE.forward (f32-accurate dots, for verification)."""
    mm = functools.partial(jnp.matmul, precision=jax.lax.Precision.HIGHEST)
    x2 = jnp.squeeze(x, axis=-1)
    c2 = jnp.squeeze(c, axis=-1)
    y = jnp.concatenate([x2, c2], axis=1)
    h = jnp.tanh(mm(y, p["enc_w1"]) + p["enc_b1"])
    h = jnp.tanh(mm(h, p["enc_w2"]) + p["enc_b2"])
    h = jnp.tanh(mm(h, p["enc_w3"]) + p["enc_b3"])
    mu = mm(h, p["mean_w"]) + p["mean_b"]
    var = jax.nn.softplus(mm(h, p["var_w"]) + p["var_b"])
    z = mu + eps * jnp.exp(0.5 * var)
    d = jnp.concatenate([z, c2], axis=1)
    d = jnp.tanh(mm(d, p["dec_w1"]) + p["dec_b1"])
    d = jnp.tanh(mm(d, p["dec_w2"]) + p["dec_b2"])
    d = jnp.tanh(mm(d, p["dec_w3"]) + p["dec_b3"])
    recon = mm(d, p["dec_w4"]) + p["dec_b4"]
    return recon.reshape(-1, FEATURE_SIZE, 1), mu, var


if __name__ == "__main__":
    key = jax.random.PRNGKey(0)
    k_params, k_x, k_c, k_eps = jax.random.split(key, 4)

    B = 16   # small demo batch; exercises the >=2-step grid path (TB=8, grid=2)
    params = init_params(k_params)
    packed = pack_params(params)

    x = jax.random.normal(k_x, (B, FEATURE_SIZE, 1), jnp.float32)
    c = jax.random.normal(k_c, (B, CONDITION_SIZE, 1), jnp.float32)
    eps = jax.random.normal(k_eps, (B, LATENT_SIZE), jnp.float32)  # reparam noise

    recon, mu, var = ekvae_forward(x, c, eps, packed)
    jax.block_until_ready((recon, mu, var))

    assert recon.shape == (B, FEATURE_SIZE, 1)
    assert mu.shape == (B, LATENT_SIZE)
    assert var.shape == (B, LATENT_SIZE)

    # Verify against the f32-accurate pure-JAX reference.  Tolerance covers the
    # possible MXU-pass-count difference between the in-kernel f32 dots and the
    # XLA reference; layout/packing bugs produce O(1) errors and are still caught.
    r_ref, mu_ref, var_ref = ekvae_reference(x, c, eps, params)
    ok = (jnp.allclose(recon, r_ref, atol=5e-3, rtol=5e-3)
          and jnp.allclose(mu, mu_ref, atol=5e-3, rtol=5e-3)
          and jnp.allclose(var, var_ref, atol=5e-3, rtol=5e-3))
    assert bool(ok), "Pallas kernel mismatch vs pure-JAX reference"

    print("KERNEL_OK")
</pallas_src>

<mosaic_0001>
module attributes {stable_mosaic.version = 11 : i64} {
  func.func @ekvae_kernel(%arg0: i32, %arg1: memref<8x11xf32, #tpu.memory_space<vmem>>, %arg2: memref<8x37xf32, #tpu.memory_space<vmem>>, %arg3: memref<8x10xf32, #tpu.memory_space<vmem>>, %arg4: memref<11x64xf32, #tpu.memory_space<vmem>>, %arg5: memref<37x80xf32, #tpu.memory_space<vmem>>, %arg6: memref<64x32xf32, #tpu.memory_space<vmem>>, %arg7: memref<32x16xf32, #tpu.memory_space<vmem>>, %arg8: memref<16x32xf32, #tpu.memory_space<vmem>>, %arg9: memref<10x16xf32, #tpu.memory_space<vmem>>, %arg10: memref<16x32xf32, #tpu.memory_space<vmem>>, %arg11: memref<32x32xf32, #tpu.memory_space<vmem>>, %arg12: memref<32x32xf32, #tpu.memory_space<vmem>>, %arg13: memref<8x128xf32, #tpu.memory_space<vmem>>, %arg14: memref<8x32xf32, #tpu.memory_space<vmem>>) attributes {dimension_semantics = [#tpu.dimension_semantics<parallel>], iteration_bounds = array<i64: 2>, scalar_prefetch = 0 : i64, scratch_operands = 0 : i64, tpu.core_type = #tpu.core_type<tc>, window_params = [{transform_indices = @transform_0, window_bounds = array<i64: 8, 11>}, {transform_indices = @transform_1, window_bounds = array<i64: 8, 37>}, {transform_indices = @transform_2, window_bounds = array<i64: 8, 10>}, {pipeline_mode = #tpu.pipeline_mode<synchronous>, transform_indices = @transform_3, window_bounds = array<i64: 11, 64>}, {pipeline_mode = #tpu.pipeline_mode<synchronous>, transform_indices = @transform_4, window_bounds = array<i64: 37, 80>}, {pipeline_mode = #tpu.pipeline_mode<synchronous>, transform_indices = @transform_5, window_bounds = array<i64: 64, 32>}, {pipeline_mode = #tpu.pipeline_mode<synchronous>, transform_indices = @transform_6, window_bounds = array<i64: 32, 16>}, {pipeline_mode = #tpu.pipeline_mode<synchronous>, transform_indices = @transform_7, window_bounds = array<i64: 16, 32>}, {pipeline_mode = #tpu.pipeline_mode<synchronous>, transform_indices = @transform_8, window_bounds = array<i64: 10, 16>}, {pipeline_mode = #tpu.pipeline_mode<synchronous>, transform_indices = @transform_9, window_bounds = array<i64: 16, 32>}, {pipeline_mode = #tpu.pipeline_mode<synchronous>, transform_indices = @transform_10, window_bounds = array<i64: 32, 32>}, {pipeline_mode = #tpu.pipeline_mode<synchronous>, transform_indices = @transform_11, window_bounds = array<i64: 32, 32>}, {pipeline_mode = #tpu.pipeline_mode<synchronous>, transform_indices = @transform_12, window_bounds = array<i64: 8, 128>}, {transform_indices = @transform_13, window_bounds = array<i64: 8, 32>}]} {
    %c0 = arith.constant 0 : index
    %c0_0 = arith.constant 0 : index
    %0 = vector.load %arg1[%c0, %c0_0] : memref<8x11xf32, #tpu.memory_space<vmem>>, vector<8x11xf32>
    %c0_1 = arith.constant 0 : index
    %c0_2 = arith.constant 0 : index
    %1 = vector.load %arg2[%c0_1, %c0_2] : memref<8x37xf32, #tpu.memory_space<vmem>>, vector<8x37xf32>
    %c0_3 = arith.constant 0 : index
    %c0_4 = arith.constant 0 : index
    %2 = vector.load %arg3[%c0_3, %c0_4] : memref<8x10xf32, #tpu.memory_space<vmem>>, vector<8x10xf32>
    %c0_5 = arith.constant 0 : index
    %c0_6 = arith.constant 0 : index
    %3 = vector.load %arg13[%c0_5, %c0_6] : memref<8x128xf32, #tpu.memory_space<vmem>>, vector<1x64xf32>
    %c1 = arith.constant 1 : index
    %c0_7 = arith.constant 0 : index
    %4 = vector.load %arg13[%c1, %c0_7] : memref<8x128xf32, #tpu.memory_space<vmem>>, vector<1x32xf32>
    %c2 = arith.constant 2 : index
    %c0_8 = arith.constant 0 : index
    %5 = vector.load %arg13[%c2, %c0_8] : memref<8x128xf32, #tpu.memory_space<vmem>>, vector<1x16xf32>
    %c3 = arith.constant 3 : index
    %c0_9 = arith.constant 0 : index
    %6 = vector.load %arg13[%c3, %c0_9] : memref<8x128xf32, #tpu.memory_space<vmem>>, vector<1x32xf32>
    %c4 = arith.constant 4 : index
    %c0_10 = arith.constant 0 : index
    %7 = vector.load %arg13[%c4, %c0_10] : memref<8x128xf32, #tpu.memory_space<vmem>>, vector<1x16xf32>
    %c5 = arith.constant 5 : index
    %c0_11 = arith.constant 0 : index
    %8 = vector.load %arg13[%c5, %c0_11] : memref<8x128xf32, #tpu.memory_space<vmem>>, vector<1x32xf32>
    %c6 = arith.constant 6 : index
    %c0_12 = arith.constant 0 : index
    %9 = vector.load %arg13[%c6, %c0_12] : memref<8x128xf32, #tpu.memory_space<vmem>>, vector<1x32xf32>
    %c7 = arith.constant 7 : index
    %c0_13 = arith.constant 0 : index
    %10 = vector.load %arg13[%c7, %c0_13] : memref<8x128xf32, #tpu.memory_space<vmem>>, vector<1x32xf32>
    %c0_14 = arith.constant 0 : index
    %c0_15 = arith.constant 0 : index
    %11 = vector.load %arg5[%c0_14, %c0_15] : memref<37x80xf32, #tpu.memory_space<vmem>>, vector<37x80xf32>
    %cst = arith.constant dense<0.000000e+00> : vector<8x80xf32>
    %12 = tpu.matmul %1, %11, %cst {dimension_numbers = #tpu.dot_dimension_numbers<[1], [0], [0], [1], [0, 0, 1, 1], [], []>} : vector<8x37xf32>, vector<37x80xf32>, vector<8x80xf32> -> vector<8x80xf32>
    %c0_16 = arith.constant 0 : index
    %c0_17 = arith.constant 0 : index
    %13 = vector.load %arg4[%c0_16, %c0_17] : memref<11x64xf32, #tpu.memory_space<vmem>>, vector<11x64xf32>
    %cst_18 = arith.constant dense<0.000000e+00> : vector<8x64xf32>
    %14 = tpu.matmul %0, %13, %cst_18 {dimension_numbers = #tpu.dot_dimension_numbers<[1], [0], [0], [1], [0, 0, 1, 1], [], []>} : vector<8x11xf32>, vector<11x64xf32>, vector<8x64xf32> -> vector<8x64xf32>
    %15 = vector.extract_strided_slice %12 {offsets = [0, 0], sizes = [8, 64], strides = [1, 1]} : vector<8x80xf32> to vector<8x64xf32>
    %16 = arith.addf %14, %15 : vector<8x64xf32>
    %17 = vector.broadcast %3 : vector<1x64xf32> to vector<8x64xf32>
    %18 = arith.addf %16, %17 : vector<8x64xf32>
    %19 = math.tanh %18 : vector<8x64xf32>
    %20 = vector.extract_strided_slice %12 {offsets = [0, 64], sizes = [8, 16], strides = [1, 1]} : vector<8x80xf32> to vector<8x16xf32>
    %c0_19 = arith.constant 0 : index
    %c0_20 = arith.constant 0 : index
    %21 = vector.load %arg6[%c0_19, %c0_20] : memref<64x32xf32, #tpu.memory_space<vmem>>, vector<64x32xf32>
    %cst_21 = arith.constant dense<0.000000e+00> : vector<8x32xf32>
    %22 = tpu.matmul %19, %21, %cst_21 {dimension_numbers = #tpu.dot_dimension_numbers<[1], [0], [0], [1], [0, 0, 1, 1], [], []>} : vector<8x64xf32>, vector<64x32xf32>, vector<8x32xf32> -> vector<8x32xf32>
    %23 = vector.broadcast %4 : vector<1x32xf32> to vector<8x32xf32>
    %24 = arith.addf %22, %23 : vector<8x32xf32>
    %25 = math.tanh %24 : vector<8x32xf32>
    %c0_22 = arith.constant 0 : index
    %c0_23 = arith.constant 0 : index
    %26 = vector.load %arg7[%c0_22, %c0_23] : memref<32x16xf32, #tpu.memory_space<vmem>>, vector<32x16xf32>
    %cst_24 = arith.constant dense<0.000000e+00> : vector<8x16xf32>
    %27 = tpu.matmul %25, %26, %cst_24 {dimension_numbers = #tpu.dot_dimension_numbers<[1], [0], [0], [1], [0, 0, 1, 1], [], []>} : vector<8x32xf32>, vector<32x16xf32>, vector<8x16xf32> -> vector<8x16xf32>
    %28 = vector.broadcast %5 : vector<1x16xf32> to vector<8x16xf32>
    %29 = arith.addf %27, %28 : vector<8x16xf32>
    %30 = math.tanh %29 : vector<8x16xf32>
    %c0_25 = arith.constant 0 : index
    %c0_26 = arith.constant 0 : index
    %31 = vector.load %arg8[%c0_25, %c0_26] : memref<16x32xf32, #tpu.memory_space<vmem>>, vector<16x32xf32>
    %cst_27 = arith.constant dense<0.000000e+00> : vector<8x32xf32>
    %32 = tpu.matmul %30, %31, %cst_27 {dimension_numbers = #tpu.dot_dimension_numbers<[1], [0], [0], [1], [0, 0, 1, 1], [], []>} : vector<8x16xf32>, vector<16x32xf32>, vector<8x32xf32> -> vector<8x32xf32>
    %33 = vector.broadcast %6 : vector<1x32xf32> to vector<8x32xf32>
    %34 = arith.addf %32, %33 : vector<8x32xf32>
    %35 = tpu.iota {dimensions = array<i32: 1>} : vector<8x32xi32>
    %c21_i32 = arith.constant 21 : i32
    %36 = vector.broadcast %c21_i32 : i32 to vector<8x32xi32>
    %37 = arith.cmpi sge, %35, %36 : vector<8x32xi32>
    %c31_i32 = arith.constant 31 : i32
    %38 = vector.broadcast %c31_i32 : i32 to vector<8x32xi32>
    %39 = arith.cmpi slt, %35, %38 : vector<8x32xi32>
    %40 = arith.andi %37, %39 : vector<8x32xi1>
    %cst_28 = arith.constant 0.000000e+00 : f32
    %41 = vector.broadcast %cst_28 : f32 to vector<8x32xf32>
    %42 = arith.maximumf %34, %41 : vector<8x32xf32>
    %43 = math.absf %34 : vector<8x32xf32>
    %cst_29 = arith.constant 0.000000e+00 : f32
    %44 = vector.broadcast %cst_29 : f32 to vector<8x32xf32>
    %45 = arith.subf %44, %43 : vector<8x32xf32>
    %46 = math.exp %45 : vector<8x32xf32>
    %cst_30 = arith.constant 1.000000e+00 : f32
    %47 = vector.broadcast %cst_30 : f32 to vector<8x32xf32>
    %48 = arith.addf %47, %46 : vector<8x32xf32>
    %49 = math.log %48 : vector<8x32xf32>
    %50 = arith.addf %42, %49 : vector<8x32xf32>
    %51 = arith.select %40, %50, %34 : vector<8x32xi1>, vector<8x32xf32>
    %52 = vector.extract_strided_slice %51 {offsets = [0, 11], sizes = [8, 10], strides = [1, 1]} : vector<8x32xf32> to vector<8x10xf32>
    %53 = vector.extract_strided_slice %51 {offsets = [0, 21], sizes = [8, 10], strides = [1, 1]} : vector<8x32xf32> to vector<8x10xf32>
    %cst_31 = arith.constant 5.000000e-01 : f32
    %54 = vector.broadcast %cst_31 : f32 to vector<8x10xf32>
    %55 = arith.mulf %54, %53 : vector<8x10xf32>
    %56 = math.exp %55 : vector<8x10xf32>
    %57 = arith.mulf %2, %56 : vector<8x10xf32>
    %58 = arith.addf %52, %57 : vector<8x10xf32>
    %c0_32 = arith.constant 0 : index
    %c0_33 = arith.constant 0 : index
    %59 = vector.load %arg9[%c0_32, %c0_33] : memref<10x16xf32, #tpu.memory_space<vmem>>, vector<10x16xf32>
    %cst_34 = arith.constant dense<0.000000e+00> : vector<8x16xf32>
    %60 = tpu.matmul %58, %59, %cst_34 {dimension_numbers = #tpu.dot_dimension_numbers<[1], [0], [0], [1], [0, 0, 1, 1], [], []>} : vector<8x10xf32>, vector<10x16xf32>, vector<8x16xf32> -> vector<8x16xf32>
    %61 = arith.addf %20, %60 : vector<8x16xf32>
    %62 = vector.broadcast %7 : vector<1x16xf32> to vector<8x16xf32>
    %63 = arith.addf %61, %62 : vector<8x16xf32>
    %64 = math.tanh %63 : vector<8x16xf32>
    %c0_35 = arith.constant 0 : index
    %c0_36 = arith.constant 0 : index
    %65 = vector.load %arg10[%c0_35, %c0_36] : memref<16x32xf32, #tpu.memory_space<vmem>>, vector<16x32xf32>
    %cst_37 = arith.constant dense<0.000000e+00> : vector<8x32xf32>
    %66 = tpu.matmul %64, %65, %cst_37 {dimension_numbers = #tpu.dot_dimension_numbers<[1], [0], [0], [1], [0, 0, 1, 1], [], []>} : vector<8x16xf32>, vector<16x32xf32>, vector<8x32xf32> -> vector<8x32xf32>
    %67 = vector.broadcast %8 : vector<1x32xf32> to vector<8x32xf32>
    %68 = arith.addf %66, %67 : vector<8x32xf32>
    %69 = math.tanh %68 : vector<8x32xf32>
    %c0_38 = arith.constant 0 : index
    %c0_39 = arith.constant 0 : index
    %70 = vector.load %arg11[%c0_38, %c0_39] : memref<32x32xf32, #tpu.memory_space<vmem>>, vector<32x32xf32>
    %cst_40 = arith.constant dense<0.000000e+00> : vector<8x32xf32>
    %71 = tpu.matmul %69, %70, %cst_40 {dimension_numbers = #tpu.dot_dimension_numbers<[1], [0], [0], [1], [0, 0, 1, 1], [], []>} : vector<8x32xf32>, vector<32x32xf32>, vector<8x32xf32> -> vector<8x32xf32>
    %72 = vector.broadcast %9 : vector<1x32xf32> to vector<8x32xf32>
    %73 = arith.addf %71, %72 : vector<8x32xf32>
    %74 = math.tanh %73 : vector<8x32xf32>
    %c0_41 = arith.constant 0 : index
    %c0_42 = arith.constant 0 : index
    %75 = vector.load %arg12[%c0_41, %c0_42] : memref<32x32xf32, #tpu.memory_space<vmem>>, vector<32x32xf32>
    %cst_43 = arith.constant dense<0.000000e+00> : vector<8x32xf32>
    %76 = tpu.matmul %74, %75, %cst_43 {dimension_numbers = #tpu.dot_dimension_numbers<[1], [0], [0], [1], [0, 0, 1, 1], [], []>} : vector<8x32xf32>, vector<32x32xf32>, vector<8x32xf32> -> vector<8x32xf32>
    %77 = vector.broadcast %10 : vector<1x32xf32> to vector<8x32xf32>
    %78 = arith.addf %76, %77 : vector<8x32xf32>
    %79 = arith.addf %78, %51 : vector<8x32xf32>
    %c0_44 = arith.constant 0 : index
    %c0_45 = arith.constant 0 : index
    %80 = vector.load %arg14[%c0_44, %c0_45] : memref<8x32xf32, #tpu.memory_space<vmem>>, vector<8x32xf32>
    tpu.vector_store %arg14[%c0_44, %c0_45], %79 {strides = array<i32>} : memref<8x32xf32, #tpu.memory_space<vmem>>, vector<8x32xf32>,
    return
  }
  func.func @transform_0(%arg0: i32) -> (i32, i32) {
    %c0_i32 = arith.constant 0 : i32
    %c0_i32_0 = arith.constant 0 : i32
    return %arg0, %c0_i32 : i32, i32
  }
  func.func @transform_1(%arg0: i32) -> (i32, i32) {
    %c0_i32 = arith.constant 0 : i32
    %c0_i32_0 = arith.constant 0 : i32
    return %arg0, %c0_i32 : i32, i32
  }
  func.func @transform_2(%arg0: i32) -> (i32, i32) {
    %c0_i32 = arith.constant 0 : i32
    %c0_i32_0 = arith.constant 0 : i32
    return %arg0, %c0_i32 : i32, i32
  }
  func.func @transform_3(%arg0: i32) -> (i32, i32) {
    %c0_i32 = arith.constant 0 : i32
    %c0_i32_0 = arith.constant 0 : i32
    %c0_i32_1 = arith.constant 0 : i32
    return %c0_i32, %c0_i32_0 : i32, i32
  }
  func.func @transform_4(%arg0: i32) -> (i32, i32) {
    %c0_i32 = arith.constant 0 : i32
    %c0_i32_0 = arith.constant 0 : i32
    %c0_i32_1 = arith.constant 0 : i32
    return %c0_i32, %c0_i32_0 : i32, i32
  }
  func.func @transform_5(%arg0: i32) -> (i32, i32) {
    %c0_i32 = arith.constant 0 : i32
    %c0_i32_0 = arith.constant 0 : i32
    %c0_i32_1 = arith.constant 0 : i32
    return %c0_i32, %c0_i32_0 : i32, i32
  }
  func.func @transform_6(%arg0: i32) -> (i32, i32) {
    %c0_i32 = arith.constant 0 : i32
    %c0_i32_0 = arith.constant 0 : i32
    %c0_i32_1 = arith.constant 0 : i32
    return %c0_i32, %c0_i32_0 : i32, i32
  }
  func.func @transform_7(%arg0: i32) -> (i32, i32) {
    %c0_i32 = arith.constant 0 : i32
    %c0_i32_0 = arith.constant 0 : i32
    %c0_i32_1 = arith.constant 0 : i32
    return %c0_i32, %c0_i32_0 : i32, i32
  }
  func.func @transform_8(%arg0: i32) -> (i32, i32) {
    %c0_i32 = arith.constant 0 : i32
    %c0_i32_0 = arith.constant 0 : i32
    %c0_i32_1 = arith.constant 0 : i32
    return %c0_i32, %c0_i32_0 : i32, i32
  }
  func.func @transform_9(%arg0: i32) -> (i32, i32) {
    %c0_i32 = arith.constant 0 : i32
    %c0_i32_0 = arith.constant 0 : i32
    %c0_i32_1 = arith.constant 0 : i32
    return %c0_i32, %c0_i32_0 : i32, i32
  }
  func.func @transform_10(%arg0: i32) -> (i32, i32) {
    %c0_i32 = arith.constant 0 : i32
    %c0_i32_0 = arith.constant 0 : i32
    %c0_i32_1 = arith.constant 0 : i32
    return %c0_i32, %c0_i32_0 : i32, i32
  }
  func.func @transform_11(%arg0: i32) -> (i32, i32) {
    %c0_i32 = arith.constant 0 : i32
    %c0_i32_0 = arith.constant 0 : i32
    %c0_i32_1 = arith.constant 0 : i32
    return %c0_i32, %c0_i32_0 : i32, i32
  }
  func.func @transform_12(%arg0: i32) -> (i32, i32) {
    %c0_i32 = arith.constant 0 : i32
    %c0_i32_0 = arith.constant 0 : i32
    %c0_i32_1 = arith.constant 0 : i32
    return %c0_i32, %c0_i32_0 : i32, i32
  }
  func.func @transform_13(%arg0: i32) -> (i32, i32) {
    %c0_i32 = arith.constant 0 : i32
    %c0_i32_0 = arith.constant 0 : i32
    return %arg0, %c0_i32 : i32, i32
  }
}

</mosaic_0001>

<llo_original>
// kernel: ekvae_forward.1
$region0: #{ekvae_forward.1}
  #allocation0 [shape = 'u32[]', space=smem, size = 0x4, offset = 0x4, fixed_abs, tag = 'smem constant byte address 0x4 - core index']
  #allocation1 [shape = 'u32[72,128]{1,0:T(1,128)}', space=vmem, size = 0x9000, scoped, tag = 'internal scratch']
  %s0 = inlined_call_operand.vmem [shape: f32[16,11], index: 0, kind: input, shape index: {}]
  %s1 = inlined_call_operand.vmem [shape: f32[16,37], index: 1, kind: input, shape index: {}]
  %s2 = inlined_call_operand.vmem [shape: f32[16,10], index: 2, kind: input, shape index: {}]
  %s3 = inlined_call_operand.hbm [shape: f32[11,64], index: 3, kind: input, shape index: {}]
  %s4 = inlined_call_operand.vmem [shape: f32[37,80], index: 4, kind: input, shape index: {}]
  %s5 = inlined_call_operand.vmem [shape: f32[64,32], index: 5, kind: input, shape index: {}]
  %s6 = inlined_call_operand.vmem [shape: f32[32,16], index: 6, kind: input, shape index: {}]
  %s7 = inlined_call_operand.hbm [shape: f32[16,32], index: 7, kind: input, shape index: {}]
  %s8 = inlined_call_operand.hbm [shape: f32[10,16], index: 8, kind: input, shape index: {}]
  %s9 = inlined_call_operand.hbm [shape: f32[16,32], index: 9, kind: input, shape index: {}]
  %s10 = inlined_call_operand.vmem [shape: f32[32,32], index: 10, kind: input, shape index: {}]
  %s11 = inlined_call_operand.vmem [shape: f32[32,32], index: 11, kind: input, shape index: {}]
  %s12 = inlined_call_operand.hbm [shape: f32[8,128], index: 12, kind: input, shape index: {}]
  %s13 = inlined_call_operand.vmem [shape: f32[16,32], index: 13, kind: output, shape index: {}]
  %s14 = sld [smem:[#allocation0]]
  $region105: #{ekvae_forward.1} parent=0
    _
  %s16 = ssub.s32 1, %s14
  %s17 = scalar_select 0, %s16, %s14
  $region1: #{ekvae_forward.1} parent=0
    #allocation2 [shape = 'u8[8192]{0}', space=vmem, size = 0x2000, scoped, tag = 'input window, operand 3, single buffered']
    #allocation3 [shape = 's32[2]{0}', space=sflag, size = 0x8, scoped, tag = 'scoped memory for ekvae_forward.1']
    #allocation4 [shape = 'u8[8192]{0}', space=vmem, size = 0x2000, scoped, tag = 'input window, operand 7, single buffered']
    #allocation5 [shape = 's32[1]{0}', space=sflag, size = 0x4, scoped, tag = 'scoped memory for ekvae_forward.1']
    #allocation6 [shape = 'u8[8192]{0}', space=vmem, size = 0x2000, scoped, tag = 'input window, operand 8, single buffered']
    #allocation7 [shape = 'u8[8192]{0}', space=vmem, size = 0x2000, scoped, tag = 'input window, operand 9, single buffered']
    #allocation8 [shape = 's32[1]{0}', space=sflag, size = 0x4, scoped, tag = 'scoped memory for ekvae_forward.1']
    #allocation9 [shape = 'u8[4096]{0}', space=vmem, size = 0x1000, scoped, tag = 'input window, operand 12, single buffered']
    %18 = vsyncpa [#allocation3], 0
    %19 = vsyncpa [#allocation5], 0
    %20 = vsyncpa [#allocation8], 0
    loop: start=0, step=1, limit=4
    $region2: #{ekvae_forward.1} parent=1 // loop_pre_header
      _
    $region3: #{ekvae_forward.1} parent=1 // loop_header
      %s22 = sphi 0, %s26
      %p23 = scmp.ge.s32.totalorder %s22, 4
      %s32 = sphi 0, %s34
      %s35 = sphi 0, %s32
      %s36 = sphi 0, %s35
      %s52 = sphi 0, %s36
      %s58 = sphi 0, %s60
      %s61 = sphi 0, %s58
      %s62 = sphi 0, %s61
      %s78 = sphi 0, %s62
      %s84 = sphi 0, %s86
      %s87 = sphi 0, %s84
      %s88 = sphi 0, %s87
      %s104 = sphi 0, %s88
      %s108 = sphi 0, %s108
      %s110 = sphi 0, %s108
      %s111 = sphi 0, %s110
      %s125 = sphi 0, %s111
      %s129 = sphi 0, %s129
      %s131 = sphi 0, %s129
      %s132 = sphi 0, %s131
      %s146 = sphi 0, %s132
      %s150 = sphi 0, %s150
      %s152 = sphi 0, %s150
      %s153 = sphi 0, %s152
      %s167 = sphi 0, %s153
      %s171 = sphi 0, %s171
      %s173 = sphi 0, %s171
      %s174 = sphi 0, %s173
      %s188 = sphi 0, %s174
      %s192 = sphi 0, %s192
      %s194 = sphi 0, %s192
      %s195 = sphi 0, %s194
      %s209 = sphi 0, %s195
      %s213 = sphi 0, %s213
      %s215 = sphi 0, %s213
      %s216 = sphi 0, %s215
      %s230 = sphi 0, %s216
      %s234 = sphi 0, %s234
      %s236 = sphi 0, %s234
      %s237 = sphi 0, %s236
      %s251 = sphi 0, %s237
      %s255 = sphi 0, %s255
      %s257 = sphi 0, %s255
      %s258 = sphi 0, %s257
      %s272 = sphi 0, %s258
      %s276 = sphi 0, %s276
      %s278 = sphi 0, %s276
      %s279 = sphi 0, %s278
      %s293 = sphi 0, %s279
      %s297 = sphi 0, %s297
      %s299 = sphi 0, %s297
      %s300 = sphi 0, %s299
      %s314 = sphi 0, %s300
      %s320 = sphi 0, %s322
      %s323 = sphi 0, %s320
      %s324 = sphi 0, %s323
      %s340 = sphi 0, %s324
    $region4: #{ekvae_forward.1} parent=1 // loop_header_branch
      %25 = sbr.rel (%p23) target = $region8
    $region5: #{ekvae_forward.1} parent=1 // loop_body
      %s27 = ssub.s32 %s22, 1
      %s28 = ssub.s32 %s22, 2
      %s29 = sadd.s32 %s22, 1
      %s30 = ssub.s32 %s22, %s29
      %p31 = scmp.eq.s32.totalorder %s30, 0
      %s33 = sadd.s32 %s32, 1
      %s34 = scalar_select %p31, %s32, %s33
      %p37 = pneg %p31
      %p38 = scmp.eq.s32.totalorder %s22, 1
      %p39 = por %p37, %p38
      %p40 = scmp.ne.s32.totalorder %s32, %s35
      %p41 = scmp.eq.s32.totalorder %s22, 0
      %p42 = por %p40, %p41
      %p43 = scmp.ne.s32.totalorder %s32, %s35
      %p44 = scmp.eq.s32.totalorder %s27, 1
      %p45 = por %p43, %p44
      %p46 = scmp.ne.s32.totalorder %s35, %s36
      %p47 = scmp.eq.s32.totalorder %s27, 0
      %p48 = por %p46, %p47
      %p49 = scmp.ne.s32.totalorder %s35, %s36
      %p50 = scmp.eq.s32.totalorder %s28, 1
      %p51 = por %p49, %p50
      %p53 = scmp.ne.s32.totalorder %s36, %s52
      %p54 = scmp.eq.s32.totalorder %s28, 0
      %p55 = por %p53, %p54
      %s56 = ssub.s32 %s22, %s29
      %p57 = scmp.eq.s32.totalorder %s56, 0
      %s59 = sadd.s32 %s58, 1
      %s60 = scalar_select %p57, %s58, %s59
      %p63 = pneg %p57
      %p64 = scmp.eq.s32.totalorder %s22, 1
      %p65 = por %p63, %p64
      %p66 = scmp.ne.s32.totalorder %s58, %s61
      %p67 = scmp.eq.s32.totalorder %s22, 0
      %p68 = por %p66, %p67
      %p69 = scmp.ne.s32.totalorder %s58, %s61
      %p70 = scmp.eq.s32.totalorder %s27, 1
      %p71 = por %p69, %p70
      %p72 = scmp.ne.s32.totalorder %s61, %s62
      %p73 = scmp.eq.s32.totalorder %s27, 0
      %p74 = por %p72, %p73
      %p75 = scmp.ne.s32.totalorder %s61, %s62
      %p76 = scmp.eq.s32.totalorder %s28, 1
      %p77 = por %p75, %p76
      %p79 = scmp.ne.s32.totalorder %s62, %s78
      %p80 = scmp.eq.s32.totalorder %s28, 0
      %p81 = por %p79, %p80
      %s82 = ssub.s32 %s22, %s29
      %p83 = scmp.eq.s32.totalorder %s82, 0
      %s85 = sadd.s32 %s84, 1
      %s86 = scalar_select %p83, %s84, %s85
      %p89 = pneg %p83
      %p90 = scmp.eq.s32.totalorder %s22, 1
      %p91 = por %p89, %p90
      %p92 = scmp.ne.s32.totalorder %s84, %s87
      %p93 = scmp.eq.s32.totalorder %s22, 0
      %p94 = por %p92, %p93
      %p95 = scmp.ne.s32.totalorder %s84, %s87
      %p96 = scmp.eq.s32.totalorder %s27, 1
      %p97 = por %p95, %p96
      %p98 = scmp.ne.s32.totalorder %s87, %s88
      %p99 = scmp.eq.s32.totalorder %s27, 0
      %p100 = por %p98, %p99
      %p101 = scmp.ne.s32.totalorder %s87, %s88
      %p102 = scmp.eq.s32.totalorder %s28, 1
      %p103 = por %p101, %p102
      %p105 = scmp.ne.s32.totalorder %s88, %s104
      %p106 = scmp.eq.s32.totalorder %s28, 0
      %p107 = por %p105, %p106
      %s109 = sadd.s32 %s108, 1
      %p112 = scmp.eq.s32.totalorder %s22, 1
      %p113 = scmp.ne.s32.totalorder %s108, %s110
      %p114 = scmp.eq.s32.totalorder %s22, 0
      %p115 = por %p113, %p114
      %p116 = scmp.ne.s32.totalorder %s108, %s110
      %p117 = scmp.eq.s32.totalorder %s27, 1
      %p118 = por %p116, %p117
      %p119 = scmp.ne.s32.totalorder %s110, %s111
      %p120 = scmp.eq.s32.totalorder %s27, 0
      %p121 = por %p119, %p120
      %p122 = scmp.ne.s32.totalorder %s110, %s111
      %p123 = scmp.eq.s32.totalorder %s28, 1
      %p124 = por %p122, %p123
      %p126 = scmp.ne.s32.totalorder %s111, %s125
      %p127 = scmp.eq.s32.totalorder %s28, 0
      %p128 = por %p126, %p127
      %s130 = sadd.s32 %s129, 1
      %p133 = scmp.eq.s32.totalorder %s22, 1
      %p134 = scmp.ne.s32.totalorder %s129, %s131
      %p135 = scmp.eq.s32.totalorder %s22, 0
      %p136 = por %p134, %p135
      %p137 = scmp.ne.s32.totalorder %s129, %s131
      %p138 = scmp.eq.s32.totalorder %s27, 1
      %p139 = por %p137, %p138
      %p140 = scmp.ne.s32.totalorder %s131, %s132
      %p141 = scmp.eq.s32.totalorder %s27, 0
      %p142 = por %p140, %p141
      %p143 = scmp.ne.s32.totalorder %s131, %s132
      %p144 = scmp.eq.s32.totalorder %s28, 1
      %p145 = por %p143, %p144
      %p147 = scmp.ne.s32.totalorder %s132, %s146
      %p148 = scmp.eq.s32.totalorder %s28, 0
      %p149 = por %p147, %p148
      %s151 = sadd.s32 %s150, 1
      %p154 = scmp.eq.s32.totalorder %s22, 1
      %p155 = scmp.ne.s32.totalorder %s150, %s152
      %p156 = scmp.eq.s32.totalorder %s22, 0
      %p157 = por %p155, %p156
      %p158 = scmp.ne.s32.totalorder %s150, %s152
      %p159 = scmp.eq.s32.totalorder %s27, 1
      %p160 = por %p158, %p159
      %p161 = scmp.ne.s32.totalorder %s152, %s153
      %p162 = scmp.eq.s32.totalorder %s27, 0
      %p163 = por %p161, %p162
      %p164 = scmp.ne.s32.totalorder %s152, %s153
      %p165 = scmp.eq.s32.totalorder %s28, 1
      %p166 = por %p164, %p165
      %p168 = scmp.ne.s32.totalorder %s153, %s167
      %p169 = scmp.eq.s32.totalorder %s28, 0
      %p170 = por %p168, %p169
      %s172 = sadd.s32 %s171, 1
      %p175 = scmp.eq.s32.totalorder %s22, 1
      %p176 = scmp.ne.s32.totalorder %s171, %s173
      %p177 = scmp.eq.s32.totalorder %s22, 0
      %p178 = por %p176, %p177
      %p179 = scmp.ne.s32.totalorder %s171, %s173
      %p180 = scmp.eq.s32.totalorder %s27, 1
      %p181 = por %p179, %p180
      %p182 = scmp.ne.s32.totalorder %s173, %s174
      %p183 = scmp.eq.s32.totalorder %s27, 0
      %p184 = por %p182, %p183
      %p185 = scmp.ne.s32.totalorder %s173, %s174
      %p186 = scmp.eq.s32.totalorder %s28, 1
      %p187 = por %p185, %p186
      %p189 = scmp.ne.s32.totalorder %s174, %s188
      %p190 = scmp.eq.s32.totalorder %s28, 0
      %p191 = por %p189, %p190
      %s193 = sadd.s32 %s192, 1
      %p196 = scmp.eq.s32.totalorder %s22, 1
      %p197 = scmp.ne.s32.totalorder %s192, %s194
      %p198 = scmp.eq.s32.totalorder %s22, 0
      %p199 = por %p197, %p198
      %p200 = scmp.ne.s32.totalorder %s192, %s194
      %p201 = scmp.eq.s32.totalorder %s27, 1
      %p202 = por %p200, %p201
      %p203 = scmp.ne.s32.totalorder %s194, %s195
      %p204 = scmp.eq.s32.totalorder %s27, 0
      %p205 = por %p203, %p204
      %p206 = scmp.ne.s32.totalorder %s194, %s195
      %p207 = scmp.eq.s32.totalorder %s28, 1
      %p208 = por %p206, %p207
      %p210 = scmp.ne.s32.totalorder %s195, %s209
      %p211 = scmp.eq.s32.totalorder %s28, 0
      %p212 = por %p210, %p211
      %s214 = sadd.s32 %s213, 1
      %p217 = scmp.eq.s32.totalorder %s22, 1
      %p218 = scmp.ne.s32.totalorder %s213, %s215
      %p219 = scmp.eq.s32.totalorder %s22, 0
      %p220 = por %p218, %p219
      %p221 = scmp.ne.s32.totalorder %s213, %s215
      %p222 = scmp.eq.s32.totalorder %s27, 1
      %p223 = por %p221, %p222
      %p224 = scmp.ne.s32.totalorder %s215, %s216
      %p225 = scmp.eq.s32.totalorder %s27, 0
      %p226 = por %p224, %p225
      %p227 = scmp.ne.s32.totalorder %s215, %s216
      %p228 = scmp.eq.s32.totalorder %s28, 1
      %p229 = por %p227, %p228
      %p231 = scmp.ne.s32.totalorder %s216, %s230
      %p232 = scmp.eq.s32.totalorder %s28, 0
      %p233 = por %p231, %p232
      %s235 = sadd.s32 %s234, 1
      %p238 = scmp.eq.s32.totalorder %s22, 1
      %p239 = scmp.ne.s32.totalorder %s234, %s236
      %p240 = scmp.eq.s32.totalorder %s22, 0
      %p241 = por %p239, %p240
      %p242 = scmp.ne.s32.totalorder %s234, %s236
      %p243 = scmp.eq.s32.totalorder %s27, 1
      %p244 = por %p242, %p243
      %p245 = scmp.ne.s32.totalorder %s236, %s237
      %p246 = scmp.eq.s32.totalorder %s27, 0
      %p247 = por %p245, %p246
      %p248 = scmp.ne.s32.totalorder %s236, %s237
      %p249 = scmp.eq.s32.totalorder %s28, 1
      %p250 = por %p248, %p249
      %p252 = scmp.ne.s32.totalorder %s237, %s251
      %p253 = scmp.eq.s32.totalorder %s28, 0
      %p254 = por %p252, %p253
      %s256 = sadd.s32 %s255, 1
      %p259 = scmp.eq.s32.totalorder %s22, 1
      %p260 = scmp.ne.s32.totalorder %s255, %s257
      %p261 = scmp.eq.s32.totalorder %s22, 0
      %p262 = por %p260, %p261
      %p263 = scmp.ne.s32.totalorder %s255, %s257
      %p264 = scmp.eq.s32.totalorder %s27, 1
      %p265 = por %p263, %p264
      %p266 = scmp.ne.s32.totalorder %s257, %s258
      %p267 = scmp.eq.s32.totalorder %s27, 0
      %p268 = por %p266, %p267
      %p269 = scmp.ne.s32.totalorder %s257, %s258
      %p270 = scmp.eq.s32.totalorder %s28, 1
      %p271 = por %p269, %p270
      %p273 = scmp.ne.s32.totalorder %s258, %s272
      %p274 = scmp.eq.s32.totalorder %s28, 0
      %p275 = por %p273, %p274
      %s277 = sadd.s32 %s276, 1
      %p280 = scmp.eq.s32.totalorder %s22, 1
      %p281 = scmp.ne.s32.totalorder %s276, %s278
      %p282 = scmp.eq.s32.totalorder %s22, 0
      %p283 = por %p281, %p282
      %p284 = scmp.ne.s32.totalorder %s276, %s278
      %p285 = scmp.eq.s32.totalorder %s27, 1
      %p286 = por %p284, %p285
      %p287 = scmp.ne.s32.totalorder %s278, %s279
      %p288 = scmp.eq.s32.totalorder %s27, 0
      %p289 = por %p287, %p288
      %p290 = scmp.ne.s32.totalorder %s278, %s279
      %p291 = scmp.eq.s32.totalorder %s28, 1
      %p292 = por %p290, %p291
      %p294 = scmp.ne.s32.totalorder %s279, %s293
      %p295 = scmp.eq.s32.totalorder %s28, 0
      %p296 = por %p294, %p295
      %s298 = sadd.s32 %s297, 1
      %p301 = scmp.eq.s32.totalorder %s22, 1
      %p302 = scmp.ne.s32.totalorder %s297, %s299
      %p303 = scmp.eq.s32.totalorder %s22, 0
      %p304 = por %p302, %p303
      %p305 = scmp.ne.s32.totalorder %s297, %s299
      %p306 = scmp.eq.s32.totalorder %s27, 1
      %p307 = por %p305, %p306
      %p308 = scmp.ne.s32.totalorder %s299, %s300
      %p309 = scmp.eq.s32.totalorder %s27, 0
      %p310 = por %p308, %p309
      %p311 = scmp.ne.s32.totalorder %s299, %s300
      %p312 = scmp.eq.s32.totalorder %s28, 1
      %p313 = por %p311, %p312
      %p315 = scmp.ne.s32.totalorder %s300, %s314
      %p316 = scmp.eq.s32.totalorder %s28, 0
      %p317 = por %p315, %p316
      %s318 = ssub.s32 %s22, %s29
      %p319 = scmp.eq.s32.totalorder %s318, 0
      %s321 = sadd.s32 %s320, 1
      %s322 = scalar_select %p319, %s320, %s321
      %p325 = pneg %p319
      %p326 = scmp.eq.s32.totalorder %s22, 1
      %p327 = por %p325, %p326
      %p328 = scmp.ne.s32.totalorder %s320, %s323
      %p329 = scmp.eq.s32.totalorder %s22, 0
      %p330 = por %p328, %p329
      %p331 = scmp.ne.s32.totalorder %s320, %s323
      %p332 = scmp.eq.s32.totalorder %s27, 1
      %p333 = por %p331, %p332
      %p334 = scmp.ne.s32.totalorder %s323, %s324
      %p335 = scmp.eq.s32.totalorder %s27, 0
      %p336 = por %p334, %p335
      %p337 = scmp.ne.s32.totalorder %s323, %s324
      %p338 = scmp.eq.s32.totalorder %s28, 1
      %p339 = por %p337, %p338
      %p341 = scmp.ne.s32.totalorder %s324, %s340
      %p342 = scmp.eq.s32.totalorder %s28, 0
      %p343 = por %p341, %p342
      %p344 = scmp.le.s32.totalorder 1, %s22
      %p345 = scmp.lt.s32.totalorder %s22, 3
      %p346 = pnand %p344, %p345
      %p347 = pneg %p346
      // Predicated region
      $region9: #{ekvae_forward.1} parent=5 // pred_check
        _
      $region10: #{ekvae_forward.1} parent=5 // pred_check_branch
        %349 = sbr.rel (%p346) target = $region12
      $region11: #{ekvae_forward.1} parent=5 // pred_region
        %s350 = ssub.s32 %s22, 1
        // Predicated region
        $region13: #{ekvae_forward.1} parent=11 // pred_check
          %p351 = pneg %p121
        $region14: #{ekvae_forward.1} parent=11 // pred_check_branch
          %353 = sbr.rel (%p351) target = $region16
        $region15: #{ekvae_forward.1} parent=11 // pred_region
          %355 = vsyncadd [#allocation3], 0
          %s356 = sshll.u32 %s3, 4
          %s357 = int_to_ptr.hbm [resolvable:$true] %s356
          %s358 = sshll.u32 [#allocation2], 4
          %s359 = int_to_ptr.vmem [resolvable:$true] %s358
          %364 = dma.hbm_to_vmem [thread:$0]  %s357, 256, %s359, [#allocation3], 128, 128, 8
        $region16: #{ekvae_forward.1} parent=11 // pred_fallthru
          _
        // Predicated region
        $region17: #{ekvae_forward.1} parent=11 // pred_check
          %p365 = pneg %p142
        $region18: #{ekvae_forward.1} parent=11 // pred_check_branch
          %367 = sbr.rel (%p365) target = $region20
        $region19: #{ekvae_forward.1} parent=11 // pred_region
          _
        $region20: #{ekvae_forward.1} parent=11 // pred_fallthru
          _
        // Predicated region
        $region21: #{ekvae_forward.1} parent=11 // pred_check
          %p368 = pneg %p163
        $region22: #{ekvae_forward.1} parent=11 // pred_check_branch
          %370 = sbr.rel (%p368) target = $region24
        $region23: #{ekvae_forward.1} parent=11 // pred_region
          _
        $region24: #{ekvae_forward.1} parent=11 // pred_fallthru
          _
        // Predicated region
        $region25: #{ekvae_forward.1} parent=11 // pred_check
          %p371 = pneg %p184
        $region26: #{ekvae_forward.1} parent=11 // pred_check_branch
          %373 = sbr.rel (%p371) target = $region28
        $region27: #{ekvae_forward.1} parent=11 // pred_region
          _
        $region28: #{ekvae_forward.1} parent=11 // pred_fallthru
          _
        // Predicated region
        $region29: #{ekvae_forward.1} parent=11 // pred_check
          %p374 = pneg %p205
        $region30: #{ekvae_forward.1} parent=11 // pred_check_branch
          %376 = sbr.rel (%p374) target = $region32
        $region31: #{ekvae_forward.1} parent=11 // pred_region
          %378 = vsyncadd [#allocation5], 0
          %s379 = sshll.u32 %s7, 4
          %s380 = int_to_ptr.hbm [resolvable:$true] %s379
          %s381 = sshll.u32 [#allocation4], 4
          %s382 = int_to_ptr.vmem [resolvable:$true] %s381
          %387 = dma.hbm_to_vmem [thread:$0]  %s380, 256, %s382, [#allocation5], 128, 128, 8
        $region32: #{ekvae_forward.1} parent=11 // pred_fallthru
          _
        // Predicated region
        $region33: #{ekvae_forward.1} parent=11 // pred_check
          %p388 = pneg %p226
        $region34: #{ekvae_forward.1} parent=11 // pred_check_branch
          %390 = sbr.rel (%p388) target = $region36
        $region35: #{ekvae_forward.1} parent=11 // pred_region
          %392 = vsyncadd [#allocation5], 0
          %s393 = sshll.u32 %s8, 4
          %s394 = int_to_ptr.hbm [resolvable:$true] %s393
          %s395 = sshll.u32 [#allocation6], 4
          %s396 = int_to_ptr.vmem [resolvable:$true] %s395
          %401 = dma.hbm_to_vmem [thread:$0]  %s394, 256, %s396, [#allocation5], 128, 128, 8
        $region36: #{ekvae_forward.1} parent=11 // pred_fallthru
          _
        // Predicated region
        $region37: #{ekvae_forward.1} parent=11 // pred_check
          %p402 = pneg %p247
        $region38: #{ekvae_forward.1} parent=11 // pred_check_branch
          %404 = sbr.rel (%p402) target = $region40
        $region39: #{ekvae_forward.1} parent=11 // pred_region
          %406 = vsyncadd [#allocation8], 0
          %s407 = sshll.u32 %s9, 4
          %s408 = int_to_ptr.hbm [resolvable:$true] %s407
          %s409 = sshll.u32 [#allocation7], 4
          %s410 = int_to_ptr.vmem [resolvable:$true] %s409
          %415 = dma.hbm_to_vmem [thread:$0]  %s408, 256, %s410, [#allocation8], 128, 128, 8
        $region40: #{ekvae_forward.1} parent=11 // pred_fallthru
          _
        // Predicated region
        $region41: #{ekvae_forward.1} parent=11 // pred_check
          %p416 = pneg %p268
        $region42: #{ekvae_forward.1} parent=11 // pred_check_branch
          %418 = sbr.rel (%p416) target = $region44
        $region43: #{ekvae_forward.1} parent=11 // pred_region
          _
        $region44: #{ekvae_forward.1} parent=11 // pred_fallthru
          _
        // Predicated region
        $region45: #{ekvae_forward.1} parent=11 // pred_check
          %p419 = pneg %p289
        $region46: #{ekvae_forward.1} parent=11 // pred_check_branch
          %421 = sbr.rel (%p419) target = $region48
        $region47: #{ekvae_forward.1} parent=11 // pred_region
          _
        $region48: #{ekvae_forward.1} parent=11 // pred_fallthru
          _
        // Predicated region
        $region49: #{ekvae_forward.1} parent=11 // pred_check
          %p422 = pneg %p310
        $region50: #{ekvae_forward.1} parent=11 // pred_check_branch
          %424 = sbr.rel (%p422) target = $region52
        $region51: #{ekvae_forward.1} parent=11 // pred_region
          %426 = vsyncadd [#allocation8], 0
          %s428 = sshll.u32 %s12, 4
          %s429 = int_to_ptr.hbm [resolvable:$true] %s428
          %s430 = sshll.u32 [#allocation9], 4
          %s431 = int_to_ptr.vmem [resolvable:$true] %s430
          %433 = dma.hbm_to_vmem [thread:$0]  %s429, 128, %s431, [#allocation8]
        $region52: #{ekvae_forward.1} parent=11 // pred_fallthru
          _
      $region12: #{ekvae_forward.1} parent=5 // pred_fallthru
        _
      %p434 = scmp.lt.s32.totalorder %s22, 2
      // Predicated region
      $region53: #{ekvae_forward.1} parent=5 // pred_check
        %p435 = pneg %p434
      $region54: #{ekvae_forward.1} parent=5 // pred_check_branch
        %437 = sbr.rel (%p435) target = $region56
      $region55: #{ekvae_forward.1} parent=5 // pred_region
        // Predicated region
        $region57: #{ekvae_forward.1} parent=55 // pred_check
          %p438 = pneg %p42
        $region58: #{ekvae_forward.1} parent=55 // pred_check_branch
          %440 = sbr.rel (%p438) target = $region60
        $region59: #{ekvae_forward.1} parent=55 // pred_region
          %p441 = scmp.lt.s32.totalorder %s22, 1
          %s442 = scalar_select %p441, %s22, 1
          %s443 = smul.addr %s442, 8
          %s444 = scalar_lea.vmem %s0, %s443
        $region60: #{ekvae_forward.1} parent=55 // pred_fallthru
          _
        // Predicated region
        $region61: #{ekvae_forward.1} parent=55 // pred_check
          %p445 = pneg %p68
        $region62: #{ekvae_forward.1} parent=55 // pred_check_branch
          %447 = sbr.rel (%p445) target = $region64
        $region63: #{ekvae_forward.1} parent=55 // pred_region
          %p448 = scmp.lt.s32.totalorder %s22, 1
          %s449 = scalar_select %p448, %s22, 1
          %s450 = smul.addr %s449, 8
          %s451 = scalar_lea.vmem %s1, %s450
        $region64: #{ekvae_forward.1} parent=55 // pred_fallthru
          _
        // Predicated region
        $region65: #{ekvae_forward.1} parent=55 // pred_check
          %p452 = pneg %p94
        $region66: #{ekvae_forward.1} parent=55 // pred_check_branch
          %454 = sbr.rel (%p452) target = $region68
        $region67: #{ekvae_forward.1} parent=55 // pred_region
          %p455 = scmp.lt.s32.totalorder %s22, 1
          %s456 = scalar_select %p455, %s22, 1
          %s457 = smul.addr %s456, 8
          %s458 = scalar_lea.vmem %s2, %s457
        $region68: #{ekvae_forward.1} parent=55 // pred_fallthru
          _
      $region56: #{ekvae_forward.1} parent=5 // pred_fallthru
        _
      %p459 = scmp.le.s32.totalorder 1, %s22
      %p460 = scmp.lt.s32.totalorder %s22, 3
      %p461 = pnand %p459, %p460
      %p462 = pneg %p461
      // Predicated region
      $region69: #{ekvae_forward.1} parent=5 // pred_check
        _
      $region70: #{ekvae_forward.1} parent=5 // pred_check_branch
        %464 = sbr.rel (%p461) target = $region72
      $region71: #{ekvae_forward.1} parent=5 // pred_region
        %s465 = ssub.s32 %s22, 1
        // Predicated region
        $region73: #{ekvae_forward.1} parent=71 // pred_check
          %p466 = pneg %p121
        $region74: #{ekvae_forward.1} parent=71 // pred_check_branch
          %468 = sbr.rel (%p466) target = $region76
        $region75: #{ekvae_forward.1} parent=71 // pred_region
          %470 = dma.done [#allocation3], 256
        $region76: #{ekvae_forward.1} parent=71 // pred_fallthru
          _
        // Predicated region
        $region77: #{ekvae_forward.1} parent=71 // pred_check
          %p471 = pneg %p205
        $region78: #{ekvae_forward.1} parent=71 // pred_check_branch
          %473 = sbr.rel (%p471) target = $region80
        $region79: #{ekvae_forward.1} parent=71 // pred_region
          %475 = dma.done [#allocation5], 256
        $region80: #{ekvae_forward.1} parent=71 // pred_fallthru
          _
        // Predicated region
        $region81: #{ekvae_forward.1} parent=71 // pred_check
          %p476 = pneg %p226
        $region82: #{ekvae_forward.1} parent=71 // pred_check_branch
          %478 = sbr.rel (%p476) target = $region84
        $region83: #{ekvae_forward.1} parent=71 // pred_region
          %480 = dma.done [#allocation5], 256
        $region84: #{ekvae_forward.1} parent=71 // pred_fallthru
          _
        // Predicated region
        $region85: #{ekvae_forward.1} parent=71 // pred_check
          %p481 = pneg %p247
        $region86: #{ekvae_forward.1} parent=71 // pred_check_branch
          %483 = sbr.rel (%p481) target = $region88
        $region87: #{ekvae_forward.1} parent=71 // pred_region
          %485 = dma.done [#allocation8], 256
        $region88: #{ekvae_forward.1} parent=71 // pred_fallthru
          _
        // Predicated region
        $region89: #{ekvae_forward.1} parent=71 // pred_check
          %p486 = pneg %p310
        $region90: #{ekvae_forward.1} parent=71 // pred_check_branch
          %488 = sbr.rel (%p486) target = $region92
        $region91: #{ekvae_forward.1} parent=71 // pred_region
          %490 = dma.done [#allocation8], 128
        $region92: #{ekvae_forward.1} parent=71 // pred_fallthru
          _
        %p491 = scmp.lt.s32.totalorder %s27, 1
        %s492 = scalar_select %p491, %s27, 1
        %s493 = smul.addr %s492, 8
        %s494 = scalar_lea.vmem %s0, %s493
        %p495 = pneg %p48
        %p496 = pneg %p45
        %p497 = scmp.lt.s32.totalorder %s27, 1
        %s498 = scalar_select %p497, %s27, 1
        %s499 = smul.addr %s498, 8
        %s500 = scalar_lea.vmem %s1, %s499
        %p501 = pneg %p74
        %p502 = pneg %p71
        %p503 = scmp.lt.s32.totalorder %s27, 1
        %s504 = scalar_select %p503, %s27, 1
        %s505 = smul.addr %s504, 8
        %s506 = scalar_lea.vmem %s2, %s505
        %p507 = pneg %p100
        %p508 = pneg %p97
        %p509 = pneg %p121
        %p510 = pneg %p118
        %p511 = pneg %p142
        %p512 = pneg %p139
        %p513 = pneg %p163
        %p514 = pneg %p160
        %p515 = pneg %p184
        %p516 = pneg %p181
        %p517 = pneg %p205
        %p518 = pneg %p202
        %p519 = pneg %p226
        %p520 = pneg %p223
        %p521 = pneg %p247
        %p522 = pneg %p244
        %p523 = pneg %p268
        %p524 = pneg %p265
        %p525 = pneg %p289
        %p526 = pneg %p286
        %p527 = pneg %p310
        %p528 = pneg %p307
        %p529 = pneg %p336
        %p530 = pneg %p333
        %p531 = scmp.lt.s32.totalorder %s27, 1
        %s532 = scalar_select %p531, %s27, 1
        %s533 = smul.addr %s532, 8
        %s534 = scalar_lea.vmem %s13, %s533
        %p535 = scmp.lt.s32.totalorder %s27, 1
        %s536 = scalar_select %p535, %s27, 1
        %s537 = smul.addr %s536, 8
        %s538 = scalar_lea.vmem %s0, %s537
        %p539 = scmp.lt.s32.totalorder %s27, 1
        %s540 = scalar_select %p539, %s27, 1
        %s541 = smul.addr %s540, 8
        %s542 = scalar_lea.vmem %s1, %s541
        %p543 = scmp.lt.s32.totalorder %s27, 1
        %s544 = scalar_select %p543, %s27, 1
        %s545 = smul.addr %s544, 8
        %s546 = scalar_lea.vmem %s2, %s545
        %p547 = scmp.lt.s32.totalorder %s27, 1
        %s548 = scalar_select %p547, %s27, 1
        %s549 = smul.addr %s548, 8
        %s550 = scalar_lea.vmem %s13, %s549
        %v551 = vld [vmem:[%s538] sm:$0xff]
        %v552 = vld [vmem:[%s542] sm:$0xff]
        %v553 = vld [vmem:[%s546] sm:$0xff]
        %v554 = vld [vmem:[#allocation9] sm:$0x1]
        %v555 = vld [vmem:[#allocation9 + $0x1] sm:$0x1]
        %v556 = vld [vmem:[#allocation9 + $0x2] sm:$0x1]
        %v557 = vld [vmem:[#allocation9 + $0x3] sm:$0x1]
        %v558 = vld [vmem:[#allocation9 + $0x4] sm:$0x1]
        %v559 = vld [vmem:[#allocation9 + $0x5] sm:$0x1]
        %v560 = vld [vmem:[#allocation9 + $0x6] sm:$0x1]
        %v561 = vld [vmem:[#allocation9 + $0x7] sm:$0x1]
        %v562 = vld [vmem:[%s4] sm:$0xff]
        %v563 = vld [vmem:[%s4 + $0x8] sm:$0xff]
        %v564 = vld [vmem:[%s4 + $0x10] sm:$0xff]
        %v565 = vld [vmem:[%s4 + $0x18] sm:$0xff]
        %v566 = vld [vmem:[%s4 + $0x20] sm:$0x1f]
        %vm567 = vcmask 302080
        %v569 = vsel %vm567, %v552, 0
        %vm571 = vcmask 1044480
        %v573 = vsel %vm571, %v566, 0
        %575 = vmatpush.msra.mxu0 0.0
        %576 = vmatpush.msra.mxu0 0.0
        %577 = vmatpush.msra.mxu0 0.0
        %578 = vmatpush.msra.mxu0 0.0
        %579 = vmatpush.msra.mxu0 0.0
        %580 = vmatpush.msra.mxu0 0.0
        %581 = vmatpush.msra.mxu0 0.0
        %582 = vmatpush.msra.mxu0 0.0
        %583 = vmatpush.msra.mxu0 0.0
        %584 = vmatpush.msra.mxu0 0.0
        %585 = vmatpush.msra.mxu0 0.0
        %586 = vmatpush.msra.mxu0 %v573
        %587 = vmatpush.msra.mxu0 %v565
        %588 = vmatpush.msra.mxu0 %v564
        %589 = vmatpush.msra.mxu0 %v563
        %590 = vmatpush.msra.mxu0 %v562
        %591 = vmatmul.f32.gmra.mxu0 %v569
        %v592 = vpop.f32.mrf.mxu0
        %v593 = vadd.f32 0.0, %v592
        %594 = vdwg.mxu0
        %v595 = vld [vmem:[#allocation2] sm:$0xff]
        %v596 = vld [vmem:[#allocation2 + $0x8] sm:$0x7]
        %vm597 = vcmask 89088
        %v599 = vsel %vm597, %v551, 0
        %vm601 = vcmask 1042432
        %v603 = vsel %vm601, %v596, 0
        %605 = vmatpush.msra.mxu0 0.0
        %606 = vmatpush.msra.mxu0 0.0
        %607 = vmatpush.msra.mxu0 0.0
        %608 = vmatpush.msra.mxu0 0.0
        %609 = vmatpush.msra.mxu0 0.0
        %610 = vmatpush.msra.mxu0 0.0
        %611 = vmatpush.msra.mxu0 0.0
        %612 = vmatpush.msra.mxu0 0.0
        %613 = vmatpush.msra.mxu0 0.0
        %614 = vmatpush.msra.mxu0 0.0
        %615 = vmatpush.msra.mxu0 0.0
        %616 = vmatpush.msra.mxu0 0.0
        %617 = vmatpush.msra.mxu0 0.0
        %618 = vmatpush.msra.mxu0 0.0
        %619 = vmatpush.msra.mxu0 %v603
        %620 = vmatpush.msra.mxu0 %v595
        %621 = vmatmul.f32.gmra.mxu0 %v599
        %v622 = vpop.f32.mrf.mxu0
        %v623 = vadd.f32 %v593, %v622
        %624 = vdwg.mxu0
        %v625 = vperm.slane %v554, 0
        %v626 = vadd.f32 %v623, %v625
        %v627 = vtanh.pop %v626
        %v628 = vld [vmem:[%s5] sm:$0xff]
        %v629 = vld [vmem:[%s5 + $0x8] sm:$0xff]
        %v630 = vld [vmem:[%s5 + $0x10] sm:$0xff]
        %v631 = vld [vmem:[%s5 + $0x18] sm:$0xff]
        %v632 = vld [vmem:[%s5 + $0x20] sm:$0xff]
        %v633 = vld [vmem:[%s5 + $0x28] sm:$0xff]
        %v634 = vld [vmem:[%s5 + $0x30] sm:$0xff]
        %v635 = vld [vmem:[%s5 + $0x38] sm:$0xff]
        %v636 = vperm.slane %v555, 0
        %vm637 = vcmask 523264
        %v639 = vsel %vm637, %v627, 0
        %641 = vmatpush.msra.mxu0 0.0
        %642 = vmatpush.msra.mxu0 0.0
        %643 = vmatpush.msra.mxu0 0.0
        %644 = vmatpush.msra.mxu0 0.0
        %645 = vmatpush.msra.mxu0 0.0
        %646 = vmatpush.msra.mxu0 0.0
        %647 = vmatpush.msra.mxu0 0.0
        %648 = vmatpush.msra.mxu0 0.0
        %649 = vmatpush.msra.mxu0 %v635
        %650 = vmatpush.msra.mxu0 %v634
        %651 = vmatpush.msra.mxu0 %v633
        %652 = vmatpush.msra.mxu0 %v632
        %653 = vmatpush.msra.mxu0 %v631
        %654 = vmatpush.msra.mxu0 %v630
        %655 = vmatpush.msra.mxu0 %v629
        %656 = vmatpush.msra.mxu0 %v628
        %657 = vmatmul.f32.gmra.mxu0 %v639
        %v658 = vpop.f32.mrf.mxu0
        %v659 = vadd.f32 %v636, %v658
        %660 = vdwg.mxu0
        %v661 = vtanh.pop %v659
        %v662 = vld [vmem:[%s6] sm:$0xff]
        %v663 = vld [vmem:[%s6 + $0x8] sm:$0xff]
        %v664 = vld [vmem:[%s6 + $0x10] sm:$0xff]
        %v665 = vld [vmem:[%s6 + $0x18] sm:$0xff]
        %v666 = vperm.slane %v556, 0
        %vm667 = vcmask 261120
        %v669 = vsel %vm667, %v661, 0
        %671 = vmatpush.msra.mxu0 0.0
        %672 = vmatpush.msra.mxu0 0.0
        %673 = vmatpush.msra.mxu0 0.0
        %674 = vmatpush.msra.mxu0 0.0
        %675 = vmatpush.msra.mxu0 0.0
        %676 = vmatpush.msra.mxu0 0.0
        %677 = vmatpush.msra.mxu0 0.0
        %678 = vmatpush.msra.mxu0 0.0
        %679 = vmatpush.msra.mxu0 0.0
        %680 = vmatpush.msra.mxu0 0.0
        %681 = vmatpush.msra.mxu0 0.0
        %682 = vmatpush.msra.mxu0 0.0
        %683 = vmatpush.msra.mxu0 %v665
        %684 = vmatpush.msra.mxu0 %v664
        %685 = vmatpush.msra.mxu0 %v663
        %686 = vmatpush.msra.mxu0 %v662
        %687 = vmatmul.f32.gmra.mxu0 %v669
        %v688 = vpop.f32.mrf.mxu0
        %v689 = vadd.f32 %v666, %v688
        %690 = vdwg.mxu0
        %v691 = vtanh.pop %v689
        %v692 = vld [vmem:[#allocation4] sm:$0xff]
        %v693 = vld [vmem:[#allocation4 + $0x8] sm:$0xff]
        %v694 = vperm.slane %v557, 0
        %vm695 = vcmask 130048
        %v697 = vsel %vm695, %v691, 0
        %699 = vmatpush.msra.mxu0 0.0
        %700 = vmatpush.msra.mxu0 0.0
        %701 = vmatpush.msra.mxu0 0.0
        %702 = vmatpush.msra.mxu0 0.0
        %703 = vmatpush.msra.mxu0 0.0
        %704 = vmatpush.msra.mxu0 0.0
        %705 = vmatpush.msra.mxu0 0.0
        %706 = vmatpush.msra.mxu0 0.0
        %707 = vmatpush.msra.mxu0 0.0
        %708 = vmatpush.msra.mxu0 0.0
        %709 = vmatpush.msra.mxu0 0.0
        %710 = vmatpush.msra.mxu0 0.0
        %711 = vmatpush.msra.mxu0 0.0
        %712 = vmatpush.msra.mxu0 0.0
        %713 = vmatpush.msra.mxu0 %v693
        %714 = vmatpush.msra.mxu0 %v692
        %715 = vmatmul.f32.gmra.mxu0 %v697
        %v716 = vpop.f32.mrf.mxu0
        %v717 = vadd.f32 %v694, %v716
        %718 = vdwg.mxu0
        %v719 = vlaneseq
        %v720 = vand.u32 %v719, 127
        %vm721 = vcmp.ge.s32.totalorder %v720, 21
        %vm722 = vcmp.lt.s32.totalorder %v720, 31
        %vm723 = vmand %vm721, %vm722
        %v724 = vmax.f32 %v717, 0.0
        %v725 = vand.u32 2147483647, %v717
        %v726 = vsub.f32 0.0, %v725
        %v727 = vmul.f32 %v726, 1.442695
        %v728 = vpow.pop %v727
        %v729 = vadd.f32 %v728, 1.0
        %v730 = vlog2.pop %v729
        %v731 = vmul.f32 %v730, 0.6931472
        %v732 = vadd.f32 %v724, %v731
        %v733 = vsel %vm723, %v732, %v717
        %v734 = vmul.f32 %v733, 0.5
        %v735 = vmul.f32 %v734, 1.442695
        %v736 = vpow.pop %v735
        %738 = vrot.lane.b32.xlu0 %v736, 107
        %v739 = vpop.permute.xlu0 %738
        %v741 = vmul.f32 %v553, %v739
        %743 = vrot.lane.b32.xlu0 %v741, 11
        %v744 = vpop.permute.xlu0 %743
        %v746 = vadd.f32 %v733, %v744
        %v747 = vld [vmem:[#allocation6] sm:$0xff]
        %v748 = vld [vmem:[#allocation6 + $0x8] sm:$0x3]
        %750 = vrot.lane.b32.xlu0 %v746, 117
        %v751 = vpop.permute.xlu0 %750
        %vm752 = vcmask 80896
        %v753 = vsel %vm752, %v751, 0
        %vm755 = vcmask 1041408
        %v757 = vsel %vm755, %v748, 0
        %759 = vmatpush.msra.mxu0 0.0
        %760 = vmatpush.msra.mxu0 0.0
        %761 = vmatpush.msra.mxu0 0.0
        %762 = vmatpush.msra.mxu0 0.0
        %763 = vmatpush.msra.mxu0 0.0
        %764 = vmatpush.msra.mxu0 0.0
        %765 = vmatpush.msra.mxu0 0.0
        %766 = vmatpush.msra.mxu0 0.0
        %767 = vmatpush.msra.mxu0 0.0
        %768 = vmatpush.msra.mxu0 0.0
        %769 = vmatpush.msra.mxu0 0.0
        %770 = vmatpush.msra.mxu0 0.0
        %771 = vmatpush.msra.mxu0 0.0
        %772 = vmatpush.msra.mxu0 0.0
        %773 = vmatpush.msra.mxu0 %v757
        %774 = vmatpush.msra.mxu0 %v747
        %775 = vmatmul.f32.gmra.mxu0 %v753
        %v776 = vpop.f32.mrf.mxu0
        %v777 = vadd.f32 0.0, %v776
        %778 = vdwg.mxu0
        %780 = vrot.lane.b32.xlu0 %v777, 64
        %v781 = vpop.permute.xlu0 %780
        %v783 = vadd.f32 %v593, %v781
        %v784 = vperm.slane %v558, 0
        %786 = vrot.lane.b32.xlu0 %v784, 64
        %v787 = vpop.permute.xlu0 %786
        %v789 = vadd.f32 %v783, %v787
        %v790 = vtanh.pop %v789
        %v791 = vld [vmem:[#allocation7] sm:$0xff]
        %v792 = vld [vmem:[#allocation7 + $0x8] sm:$0xff]
        %v793 = vperm.slane %v559, 0
        %795 = vrot.lane.b32.xlu0 %v790, 64
        %v796 = vpop.permute.xlu0 %795
        %v797 = vsel %vm695, %v796, 0
        %799 = vmatpush.msra.mxu0 0.0
        %800 = vmatpush.msra.mxu0 0.0
        %801 = vmatpush.msra.mxu0 0.0
        %802 = vmatpush.msra.mxu0 0.0
        %803 = vmatpush.msra.mxu0 0.0
        %804 = vmatpush.msra.mxu0 0.0
        %805 = vmatpush.msra.mxu0 0.0
        %806 = vmatpush.msra.mxu0 0.0
        %807 = vmatpush.msra.mxu0 0.0
        %808 = vmatpush.msra.mxu0 0.0
        %809 = vmatpush.msra.mxu0 0.0
        %810 = vmatpush.msra.mxu0 0.0
        %811 = vmatpush.msra.mxu0 0.0
        %812 = vmatpush.msra.mxu0 0.0
        %813 = vmatpush.msra.mxu0 %v792
        %814 = vmatpush.msra.mxu0 %v791
        %815 = vmatmul.f32.gmra.mxu0 %v797
        %v816 = vpop.f32.mrf.mxu0
        %v817 = vadd.f32 %v793, %v816
        %818 = vdwg.mxu0
        %v819 = vtanh.pop %v817
        %v820 = vld [vmem:[%s10] sm:$0xff]
        %v821 = vld [vmem:[%s10 + $0x8] sm:$0xff]
        %v822 = vld [vmem:[%s10 + $0x10] sm:$0xff]
        %v823 = vld [vmem:[%s10 + $0x18] sm:$0xff]
        %v824 = vperm.slane %v560, 0
        %v826 = vsel %vm667, %v819, 0
        %828 = vmatpush.msra.mxu0 0.0
        %829 = vmatpush.msra.mxu0 0.0
        %830 = vmatpush.msra.mxu0 0.0
        %831 = vmatpush.msra.mxu0 0.0
        %832 = vmatpush.msra.mxu0 0.0
        %833 = vmatpush.msra.mxu0 0.0
        %834 = vmatpush.msra.mxu0 0.0
        %835 = vmatpush.msra.mxu0 0.0
        %836 = vmatpush.msra.mxu0 0.0
        %837 = vmatpush.msra.mxu0 0.0
        %838 = vmatpush.msra.mxu0 0.0
        %839 = vmatpush.msra.mxu0 0.0
        %840 = vmatpush.msra.mxu0 %v823
        %841 = vmatpush.msra.mxu0 %v822
        %842 = vmatpush.msra.mxu0 %v821
        %843 = vmatpush.msra.mxu0 %v820
        %844 = vmatmul.f32.gmra.mxu0 %v826
        %v845 = vpop.f32.mrf.mxu0
        %v846 = vadd.f32 %v824, %v845
        %847 = vdwg.mxu0
        %v848 = vtanh.pop %v846
        %v849 = vld [vmem:[%s11] sm:$0xff]
        %v850 = vld [vmem:[%s11 + $0x8] sm:$0xff]
        %v851 = vld [vmem:[%s11 + $0x10] sm:$0xff]
        %v852 = vld [vmem:[%s11 + $0x18] sm:$0xff]
        %v853 = vperm.slane %v561, 0
        %v855 = vsel %vm667, %v848, 0
        %857 = vmatpush.msra.mxu0 0.0
        %858 = vmatpush.msra.mxu0 0.0
        %859 = vmatpush.msra.mxu0 0.0
        %860 = vmatpush.msra.mxu0 0.0
        %861 = vmatpush.msra.mxu0 0.0
        %862 = vmatpush.msra.mxu0 0.0
        %863 = vmatpush.msra.mxu0 0.0
        %864 = vmatpush.msra.mxu0 0.0
        %865 = vmatpush.msra.mxu0 0.0
        %866 = vmatpush.msra.mxu0 0.0
        %867 = vmatpush.msra.mxu0 0.0
        %868 = vmatpush.msra.mxu0 0.0
        %869 = vmatpush.msra.mxu0 %v852
        %870 = vmatpush.msra.mxu0 %v851
        %871 = vmatpush.msra.mxu0 %v850
        %872 = vmatpush.msra.mxu0 %v849
        %873 = vmatmul.f32.gmra.mxu0 %v855
        %v874 = vpop.f32.mrf.mxu0
        %v875 = vadd.f32 %v853, %v874
        %876 = vdwg.mxu0
        %v877 = vadd.f32 %v875, %v733
        %878 = vst.msk [vmem:[%s550] sm:$0xff] %vm667, %v877
        %p879 = scmp.lt.s32.totalorder %s27, 1
        %s880 = scalar_select %p879, %s27, 1
        %s881 = smul.addr %s880, 8
        %s882 = scalar_lea.vmem %s13, %s881
        // Predicated region
        $region93: #{ekvae_forward.1} parent=71 // pred_check
          %p883 = pneg %p333
        $region94: #{ekvae_forward.1} parent=71 // pred_check_branch
          %885 = sbr.rel (%p883) target = $region96
        $region95: #{ekvae_forward.1} parent=71 // pred_region
          _
        $region96: #{ekvae_forward.1} parent=71 // pred_fallthru
          _
      $region72: #{ekvae_forward.1} parent=5 // pred_fallthru
        _
      %p886 = scmp.le.s32.totalorder 2, %s22
      // Predicated region
      $region97: #{ekvae_forward.1} parent=5 // pred_check
        %p887 = pneg %p886
      $region98: #{ekvae_forward.1} parent=5 // pred_check_branch
        %889 = sbr.rel (%p887) target = $region100
      $region99: #{ekvae_forward.1} parent=5 // pred_region
        %s890 = ssub.s32 %s22, 2
        // Predicated region
        $region101: #{ekvae_forward.1} parent=99 // pred_check
          %p891 = pneg %p339
        $region102: #{ekvae_forward.1} parent=99 // pred_check_branch
          %893 = sbr.rel (%p891) target = $region104
        $region103: #{ekvae_forward.1} parent=99 // pred_region
          %p894 = scmp.lt.s32.totalorder %s28, 1
          %s895 = scalar_select %p894, %s28, 1
          %s896 = smul.addr %s895, 8
          %s897 = scalar_lea.vmem %s13, %s896
        $region104: #{ekvae_forward.1} parent=99 // pred_fallthru
          _
      $region100: #{ekvae_forward.1} parent=5 // pred_fallthru
        _
    $region6: #{ekvae_forward.1} parent=1 // loop_footer
      %s26 = sadd.s32 1, %s22
    $region7: #{ekvae_forward.1} parent=1 // loop_footer_branch
      %21 = sbr.rel target = $region3
    $region8: #{ekvae_forward.1} parent=1 // loop_exit
      _
    %898 = vsyncpa [#allocation3], 1
    %s899 = scalar_lea.sflag [#allocation3], 1
    %900 = vsyncpa %s899, 1
    %901 = vsyncpa [#allocation5], 1
    %902 = vsyncpa [#allocation8], 1

</llo_original>
